<compile_context>
chip_gen: v7x
topology: tpu7x:2x2x1
jax: 0.10.0
libtpu: 0.0.40
codegen_flags: <defaults>
</compile_context>

<pallas_src>
import math

import jax
import jax.numpy as jnp
from jax.experimental import pallas as pl
from jax.experimental.pallas import tpu as pltpu


def self_attn_kernel(x_ref, w_ref, o_ref):
    """Fused QKV projection + scaled dot-product attention for one batch tile.

    x_ref : (B, L, E)    input block (bf16), B = batch tile
    w_ref : (E, 3*P)     fused [Wq*scale | Wk | Wv], each lane-padded to P=128 (bf16)
    o_ref : (B, L, V)    output block at the true value size V
    """
    B, L, E = x_ref.shape
    P = w_ref.shape[1] // 3
    V = o_ref.shape[-1]

    x = x_ref[...]                 # bf16 operands straight into the MXU
    w = w_ref[...]

    # Pack all B*L rows into a single MXU matmul (fills the systolic-array rows).
    x2 = x.reshape(B * L, E)
    qkv = jnp.dot(x2, w, preferred_element_type=jnp.float32)     # (B*L, 3P), f32 acc
    qkv = qkv.astype(x.dtype)                                     # bf16 for next matmuls

    # Lane-aligned slices (offsets are multiples of 128) -> no cross-lane shuffles.
    q = qkv[:, 0 * P:1 * P].reshape(B, L, P)    # already scaled by 1/sqrt(K) via Wq
    k = qkv[:, 1 * P:2 * P].reshape(B, L, P)
    v = qkv[:, 2 * P:3 * P].reshape(B, L, P)

    # Scores: contract the last dim of both operands directly (no k.T materialization).
    s = jnp.einsum("bqd,bkd->bqk", q, k, preferred_element_type=jnp.float32)

    # Online-style numerically-stable softmax numerator in f32 (safe on v5e too).
    s = s - jnp.max(s, axis=-1, keepdims=True)
    p = jnp.exp(s)                                                # (B, L, L) f32
    row_sum = jnp.sum(p, axis=-1, keepdims=True)                  # (B, L, 1) f32

    # PV matmul with UNNORMALIZED probabilities (bf16 operands, f32 accumulation),
    # then normalize the (<=128-lane) output instead of the (L, L) tile.
    out = jnp.einsum("bqk,bkd->bqd", p.astype(v.dtype), v,
                     preferred_element_type=jnp.float32)          # (B, L, P) f32
    inv = 1.0 / row_sum                                           # exact reciprocal
    # dropout=0 in the module -> identity.
    o_ref[...] = (out[..., :V] * inv).astype(o_ref.dtype)


def fuse_qkv_weights(wq, wk, wv, *, dtype=jnp.bfloat16, lane_pad=128):
    """Build the fused, lane-padded [Wq/sqrt(K) | Wk | Wv] matrix ONCE (init-time)."""
    E, K = wq.shape
    V = wv.shape[1]
    P = lane_pad
    assert K <= P and V <= P, "key/value size must fit one 128-lane group"
    scale = 1.0 / math.sqrt(K)
    w = jnp.zeros((E, 3 * P), dtype=jnp.float32)
    w = w.at[:, 0:K].set(wq.astype(jnp.float32) * scale)   # fold 1/sqrt(K) in f32
    w = w.at[:, P:P + K].set(wk.astype(jnp.float32))
    w = w.at[:, 2 * P:2 * P + V].set(wv.astype(jnp.float32))
    return w.astype(dtype)


def self_attention_fused(x, w_qkv, value_size, *, compute_dtype=jnp.bfloat16):
    """x: (N, L, E); w_qkv: (E, 3*128) fused bf16 weights -> (N, L, value_size)."""
    N, L, E = x.shape
    P = w_qkv.shape[1] // 3
    out_dtype = x.dtype

    x_c = x.astype(compute_dtype)
    w_c = w_qkv.astype(compute_dtype)   # no-op when fused weights are already bf16

    # ---- per-generation VMEM budget -------------------------------------------------
    try:
        info = pltpu.get_tpu_info()
        vmem_cap = int(getattr(info, "vmem_capacity_bytes", 64 * 1024 * 1024))
    except Exception:  # pragma: no cover - conservative fallback (v7x per-TC)
        vmem_cap = 64 * 1024 * 1024
    vmem_limit = int(vmem_cap * 0.75)          # leave headroom for the compiler
    tile_budget = vmem_limit // 2              # inputs/outputs/intermediates share

    cbytes = jnp.dtype(compute_dtype).itemsize
    per_b = (2 * L * E * cbytes                # x block, double-buffered
             + L * 3 * P * (4 + cbytes)        # qkv f32 accumulator + bf16 copy
             + L * L * (4 + 4 + cbytes)        # s, p (f32) + bf16 p for PV matmul
             + L * P * 4                       # PV f32 accumulator
             + 2 * L * value_size * 4)         # output block, double-buffered
    per_b = int(per_b * 1.5)                   # safety factor

    # ---- batch-tile selection --------------------------------------------------------
    target_rows = 512                          # ~85%+ of HBM roofline; fills 256-row MXU
    b_tile = max(1, min(N, target_rows // max(L, 1)))
    b_tile = min(b_tile, max(1, tile_budget // per_b))
    if N >= 2:
        # Keep >=2 grid steps along the "parallel" axis so v7x's 2nd TensorCore has work.
        b_tile = min(b_tile, max(1, N // 2))

    n_blocks = pl.cdiv(N, b_tile)
    N_pad = n_blocks * b_tile
    if N_pad != N:
        # Finite zero padding: pad rows get a uniform softmax (no NaN/Inf) and are
        # sliced off below, so they can never poison real rows.
        x_c = jnp.pad(x_c, ((0, N_pad - N), (0, 0), (0, 0)))

    out = pl.pallas_call(
        self_attn_kernel,
        out_shape=jax.ShapeDtypeStruct((N_pad, L, value_size), out_dtype),
        grid=(n_blocks,),
        in_specs=[
            pl.BlockSpec((b_tile, L, E), lambda b: (b, 0, 0)),
            # Constant block index across the grid -> fetched once by the pipeline.
            pl.BlockSpec((E, 3 * P), lambda b: (0, 0)),
        ],
        # Block == full array dims on the last two axes, so the true V last-dim is legal;
        # writing V directly avoids an 8x-padded HBM write + separate XLA slice pass.
        out_specs=pl.BlockSpec((b_tile, L, value_size), lambda b: (b, 0, 0)),
        compiler_params=pltpu.CompilerParams(
            dimension_semantics=("parallel",),
            vmem_limit_bytes=vmem_limit,
        ),
    )(x_c, w_c)

    return out[:N] if N_pad != N else out


def self_attention(x, wq, wk, wv):
    """Convenience wrapper. For repeated calls, hoist fuse_qkv_weights() to init time."""
    w_qkv = fuse_qkv_weights(wq, wk, wv)
    return self_attention_fused(x, w_qkv, wv.shape[1])


def self_attention_ref(x, wq, wk, wv):
    q = x @ wq
    k = x @ wk
    v = x @ wv
    s = jnp.einsum("nld,nmd->nlm", q, k) / math.sqrt(wq.shape[1])
    p = jax.nn.softmax(s, axis=-1)
    return jnp.einsum("nlm,nmv->nlv", p, v)


if __name__ == "__main__":
    # Small shapes consistent with the module: N=2, L=8, embed_dim=32,
    # key_size=16, value_size=16.
    N, L, E, K, V = 2, 8, 32, 16, 16

    key = jax.random.PRNGKey(0)
    kx, kq, kk, kv = jax.random.split(key, 4)

    x = jax.random.normal(kx, (N, L, E), dtype=jnp.float32)
    # Deterministic weights (mimicking nn.Linear init scale), stored as (in, out).
    bound = 1.0 / math.sqrt(E)
    wq = jax.random.uniform(kq, (E, K), jnp.float32, -bound, bound)
    wk = jax.random.uniform(kk, (E, K), jnp.float32, -bound, bound)
    wv = jax.random.uniform(kv, (E, V), jnp.float32, -bound, bound)

    # Fuse + lane-pad the projection weights ONCE (init-time, not per call).
    w_qkv = fuse_qkv_weights(wq, wk, wv)

    out = jax.block_until_ready(self_attention_fused(x, w_qkv, V))

    ref = self_attention_ref(x, wq, wk, wv)
    assert out.shape == (N, L, V)
    err = float(jnp.max(jnp.abs(out - ref)))
    # bf16 MXU operands (with f32 accumulation) vs the pure-f32 reference -> ~1e-2 tol.
    assert jnp.allclose(out, ref, atol=2e-2, rtol=2e-2), err

    print("KERNEL_OK")
</pallas_src>

<mosaic_0001>
module attributes {stable_mosaic.version = 11 : i64} {
  func.func @self_attn_kernel(%arg0: i32, %arg1: memref<1x8x32xbf16, #tpu.memory_space<vmem>>, %arg2: memref<32x384xbf16, #tpu.memory_space<vmem>>, %arg3: memref<1x8x16xf32, #tpu.memory_space<vmem>>) attributes {dimension_semantics = [#tpu.dimension_semantics<parallel>], iteration_bounds = array<i64: 2>, scalar_prefetch = 0 : i64, scratch_operands = 0 : i64, tpu.core_type = #tpu.core_type<tc>, window_params = [{transform_indices = @transform_0, window_bounds = array<i64: 1, 8, 32>}, {pipeline_mode = #tpu.pipeline_mode<synchronous>, transform_indices = @transform_1, window_bounds = array<i64: 32, 384>}, {transform_indices = @transform_2, window_bounds = array<i64: 1, 8, 16>}]} {
    %c0 = arith.constant 0 : index
    %c0_0 = arith.constant 0 : index
    %c0_1 = arith.constant 0 : index
    %0 = vector.load %arg1[%c0, %c0_0, %c0_1] : memref<1x8x32xbf16, #tpu.memory_space<vmem>>, vector<1x8x32xbf16>
    %c0_2 = arith.constant 0 : index
    %c0_3 = arith.constant 0 : index
    %1 = vector.load %arg2[%c0_2, %c0_3] : memref<32x384xbf16, #tpu.memory_space<vmem>>, vector<32x384xbf16>
    %2 = vector.shape_cast %0 : vector<1x8x32xbf16> to vector<8x32xbf16>
    %cst = arith.constant dense<0.000000e+00> : vector<8x384xf32>
    %3 = tpu.matmul %2, %1, %cst {dimension_numbers = #tpu.dot_dimension_numbers<[1], [0], [0], [1], [0, 0, 1, 1], [], []>} : vector<8x32xbf16>, vector<32x384xbf16>, vector<8x384xf32> -> vector<8x384xf32>
    %4 = arith.truncf %3 : vector<8x384xf32> to vector<8x384xbf16>
    %5 = vector.extract_strided_slice %4 {offsets = [0, 0], sizes = [8, 128], strides = [1, 1]} : vector<8x384xbf16> to vector<8x128xbf16>
    %6 = vector.shape_cast %5 : vector<8x128xbf16> to vector<1x8x128xbf16>
    %7 = vector.extract_strided_slice %4 {offsets = [0, 128], sizes = [8, 128], strides = [1, 1]} : vector<8x384xbf16> to vector<8x128xbf16>
    %8 = vector.shape_cast %7 : vector<8x128xbf16> to vector<1x8x128xbf16>
    %9 = vector.extract_strided_slice %4 {offsets = [0, 256], sizes = [8, 128], strides = [1, 1]} : vector<8x384xbf16> to vector<8x128xbf16>
    %10 = vector.shape_cast %9 : vector<8x128xbf16> to vector<1x8x128xbf16>
    "tpu.trace_start"() <{level = 10 : i32, message = "bqd,bkd->bqk"}> : () -> ()
    %cst_4 = arith.constant dense<0.000000e+00> : vector<1x8x8xf32>
    %11 = tpu.matmul %6, %8, %cst_4 {dimension_numbers = #tpu.dot_dimension_numbers<[2], [2], [1], [1], [0, 0, 0, 1, 1, 1], [0], [0]>} : vector<1x8x128xbf16>, vector<1x8x128xbf16>, vector<1x8x8xf32> -> vector<1x8x8xf32>
    "tpu.trace_stop"() : () -> ()
    %cst_5 = arith.constant dense<0xFF800000> : vector<1x8xf32>
    %12 = vector.multi_reduction <maximumf>, %11, %cst_5 [2] : vector<1x8x8xf32> to vector<1x8xf32>
    %13 = vector.shape_cast %12 : vector<1x8xf32> to vector<1x8x1xf32>
    %14 = vector.broadcast %13 : vector<1x8x1xf32> to vector<1x8x8xf32>
    %15 = arith.subf %11, %14 : vector<1x8x8xf32>
    %16 = math.exp %15 : vector<1x8x8xf32>
    %cst_6 = arith.constant dense<0.000000e+00> : vector<1x8xf32>
    %17 = vector.multi_reduction <add>, %16, %cst_6 [2] : vector<1x8x8xf32> to vector<1x8xf32>
    %18 = vector.shape_cast %17 : vector<1x8xf32> to vector<1x8x1xf32>
    %19 = arith.truncf %16 : vector<1x8x8xf32> to vector<1x8x8xbf16>
    "tpu.trace_start"() <{level = 10 : i32, message = "bqk,bkd->bqd"}> : () -> ()
    %cst_7 = arith.constant dense<0.000000e+00> : vector<1x8x128xf32>
    %20 = tpu.matmul %19, %10, %cst_7 {dimension_numbers = #tpu.dot_dimension_numbers<[2], [1], [1], [2], [0, 0, 0, 1, 1, 2], [0], [0]>} : vector<1x8x8xbf16>, vector<1x8x128xbf16>, vector<1x8x128xf32> -> vector<1x8x128xf32>
    "tpu.trace_stop"() : () -> ()
    %cst_8 = arith.constant 1.000000e+00 : f32
    %21 = vector.broadcast %cst_8 : f32 to vector<1x8x1xf32>
    %22 = arith.divf %21, %18 : vector<1x8x1xf32>
    %23 = vector.extract_strided_slice %20 {offsets = [0, 0, 0], sizes = [1, 8, 16], strides = [1, 1, 1]} : vector<1x8x128xf32> to vector<1x8x16xf32>
    %24 = vector.broadcast %22 : vector<1x8x1xf32> to vector<1x8x16xf32>
    %25 = arith.mulf %23, %24 : vector<1x8x16xf32>
    %c0_9 = arith.constant 0 : index
    %c0_10 = arith.constant 0 : index
    %c0_11 = arith.constant 0 : index
    %26 = vector.load %arg3[%c0_9, %c0_10, %c0_11] : memref<1x8x16xf32, #tpu.memory_space<vmem>>, vector<1x8x16xf32>
    tpu.vector_store %arg3[%c0_9, %c0_10, %c0_11], %25 {strides = array<i32>} : memref<1x8x16xf32, #tpu.memory_space<vmem>>, vector<1x8x16xf32>,
    return
  }
  func.func @transform_0(%arg0: i32) -> (i32, i32, i32) {
    %c0_i32 = arith.constant 0 : i32
    %c0_i32_0 = arith.constant 0 : i32
    %c0_i32_1 = arith.constant 0 : i32
    return %arg0, %c0_i32, %c0_i32_0 : i32, i32, i32
  }
  func.func @transform_1(%arg0: i32) -> (i32, i32) {
    %c0_i32 = arith.constant 0 : i32
    %c0_i32_0 = arith.constant 0 : i32
    %c0_i32_1 = arith.constant 0 : i32
    return %c0_i32, %c0_i32_0 : i32, i32
  }
  func.func @transform_2(%arg0: i32) -> (i32, i32, i32) {
    %c0_i32 = arith.constant 0 : i32
    %c0_i32_0 = arith.constant 0 : i32
    %c0_i32_1 = arith.constant 0 : i32
    return %arg0, %c0_i32, %c0_i32_0 : i32, i32, i32
  }
}

</mosaic_0001>

<llo_original>
// kernel: tpu_custom_call.1
$region0: #{tpu_custom_call.1}
  #allocation0 [shape = 'u32[]', space=smem, size = 0x4, offset = 0x4, fixed_abs, tag = 'smem constant byte address 0x4 - core index']
  #allocation1 [shape = 'u32[144,128]{1,0:T(1,128)}', space=vmem, size = 0x12000, scoped, tag = 'internal scratch']
  %s0 = inlined_call_operand.hbm [shape: bf16[2,8,32], index: 0, kind: input, shape index: {}]
  %s1 = inlined_call_operand.hbm [shape: bf16[32,384], index: 1, kind: input, shape index: {}]
  %s2 = inlined_call_operand.hbm [shape: f32[2,8,16], index: 2, kind: output, shape index: {}]
  %s3 = sld [smem:[#allocation0]]
  $region49: #{tpu_custom_call.1} parent=0
    _
  %s5 = ssub.s32 1, %s3
  %s6 = scalar_select 0, %s5, %s3
  $region1: #{tpu_custom_call.1} parent=0
    #allocation2 [shape = 'u8[4096]{0}', space=vmem, size = 0x1000, scoped, tag = 'input window, operand 0']
    #allocation3 [shape = 's32[2]{0}', space=sflag, size = 0x8, scoped, tag = 'scoped memory for tpu_custom_call.1']
    #allocation4 [shape = 's32[2]{0}', space=sflag, size = 0x8, scoped, tag = 'scoped memory for tpu_custom_call.1']
    #allocation5 [shape = 'u8[24576]{0}', space=vmem, size = 0x6000, scoped, tag = 'input window, operand 1, single buffered']
    #allocation6 [shape = 's32[1]{0}', space=sflag, size = 0x4, scoped, tag = 'scoped memory for tpu_custom_call.1']
    #allocation7 [shape = 'u8[8192]{0}', space=vmem, size = 0x2000, scoped, tag = 'output window, operand 0']
    %7 = vsyncpa [#allocation3], 0
    %s8 = scalar_lea.sflag [#allocation3], 1
    %9 = vsyncpa %s8, 0
    %10 = vsyncpa [#allocation6], 0
    %11 = vsyncpa [#allocation4], 0
    %s12 = scalar_lea.sflag [#allocation4], 1
    %13 = vsyncpa %s12, 0
    loop: start=0, step=1, limit=4
    $region2: #{tpu_custom_call.1} parent=1 // loop_pre_header
      _
    $region3: #{tpu_custom_call.1} parent=1 // loop_header
      %s15 = sphi 0, %s19
      %p16 = scmp.ge.s32.totalorder %s15, 4
      %s25 = sphi 0, %s27
      %s28 = sphi 0, %s25
      %s29 = sphi 0, %s28
      %s45 = sphi 0, %s29
      %s49 = sphi 0, %s49
      %s51 = sphi 0, %s49
      %s52 = sphi 0, %s51
      %s66 = sphi 0, %s52
      %s72 = sphi 0, %s74
      %s75 = sphi 0, %s72
      %s76 = sphi 0, %s75
      %s92 = sphi 0, %s76
    $region4: #{tpu_custom_call.1} parent=1 // loop_header_branch
      %18 = sbr.rel (%p16) target = $region8
    $region5: #{tpu_custom_call.1} parent=1 // loop_body
      %s20 = ssub.s32 %s15, 1
      %s21 = ssub.s32 %s15, 2
      %s22 = sadd.s32 %s15, 1
      %s23 = ssub.s32 %s15, %s22
      %p24 = scmp.eq.s32.totalorder %s23, 0
      %s26 = sadd.s32 %s25, 1
      %s27 = scalar_select %p24, %s25, %s26
      %p30 = pneg %p24
      %p31 = scmp.eq.s32.totalorder %s15, 1
      %p32 = por %p30, %p31
      %p33 = scmp.ne.s32.totalorder %s25, %s28
      %p34 = scmp.eq.s32.totalorder %s15, 0
      %p35 = por %p33, %p34
      %p36 = scmp.ne.s32.totalorder %s25, %s28
      %p37 = scmp.eq.s32.totalorder %s20, 1
      %p38 = por %p36, %p37
      %p39 = scmp.ne.s32.totalorder %s28, %s29
      %p40 = scmp.eq.s32.totalorder %s20, 0
      %p41 = por %p39, %p40
      %p42 = scmp.ne.s32.totalorder %s28, %s29
      %p43 = scmp.eq.s32.totalorder %s21, 1
      %p44 = por %p42, %p43
      %p46 = scmp.ne.s32.totalorder %s29, %s45
      %p47 = scmp.eq.s32.totalorder %s21, 0
      %p48 = por %p46, %p47
      %s50 = sadd.s32 %s49, 1
      %p53 = scmp.eq.s32.totalorder %s15, 1
      %p54 = scmp.ne.s32.totalorder %s49, %s51
      %p55 = scmp.eq.s32.totalorder %s15, 0
      %p56 = por %p54, %p55
      %p57 = scmp.ne.s32.totalorder %s49, %s51
      %p58 = scmp.eq.s32.totalorder %s20, 1
      %p59 = por %p57, %p58
      %p60 = scmp.ne.s32.totalorder %s51, %s52
      %p61 = scmp.eq.s32.totalorder %s20, 0
      %p62 = por %p60, %p61
      %p63 = scmp.ne.s32.totalorder %s51, %s52
      %p64 = scmp.eq.s32.totalorder %s21, 1
      %p65 = por %p63, %p64
      %p67 = scmp.ne.s32.totalorder %s52, %s66
      %p68 = scmp.eq.s32.totalorder %s21, 0
      %p69 = por %p67, %p68
      %s70 = ssub.s32 %s15, %s22
      %p71 = scmp.eq.s32.totalorder %s70, 0
      %s73 = sadd.s32 %s72, 1
      %s74 = scalar_select %p71, %s72, %s73
      %p77 = pneg %p71
      %p78 = scmp.eq.s32.totalorder %s15, 1
      %p79 = por %p77, %p78
      %p80 = scmp.ne.s32.totalorder %s72, %s75
      %p81 = scmp.eq.s32.totalorder %s15, 0
      %p82 = por %p80, %p81
      %p83 = scmp.ne.s32.totalorder %s72, %s75
      %p84 = scmp.eq.s32.totalorder %s20, 1
      %p85 = por %p83, %p84
      %p86 = scmp.ne.s32.totalorder %s75, %s76
      %p87 = scmp.eq.s32.totalorder %s20, 0
      %p88 = por %p86, %p87
      %p89 = scmp.ne.s32.totalorder %s75, %s76
      %p90 = scmp.eq.s32.totalorder %s21, 1
      %p91 = por %p89, %p90
      %p93 = scmp.ne.s32.totalorder %s76, %s92
      %p94 = scmp.eq.s32.totalorder %s21, 0
      %p95 = por %p93, %p94
      %p96 = scmp.le.s32.totalorder 1, %s15
      %p97 = scmp.lt.s32.totalorder %s15, 3
      %p98 = pnand %p96, %p97
      %p99 = pneg %p98
      // Predicated region
      $region9: #{tpu_custom_call.1} parent=5 // pred_check
        _
      $region10: #{tpu_custom_call.1} parent=5 // pred_check_branch
        %101 = sbr.rel (%p98) target = $region12
      $region11: #{tpu_custom_call.1} parent=5 // pred_region
        %s102 = ssub.s32 %s15, 1
        // Predicated region
        $region13: #{tpu_custom_call.1} parent=11 // pred_check
          %p103 = pneg %p62
        $region14: #{tpu_custom_call.1} parent=11 // pred_check_branch
          %105 = sbr.rel (%p103) target = $region16
        $region15: #{tpu_custom_call.1} parent=11 // pred_region
          %s107 = ssub.s32 768, 768
          %108 = vsyncadd [#allocation6], %s107
          %s109 = sshll.u32 [#allocation5], 4
          %s110 = int_to_ptr.vmem [resolvable:$true] %s109
          %115 = dma.hbm_to_vmem [thread:$0]  %s1, 768, %s110, [#allocation6], 192, 192, 12
        $region16: #{tpu_custom_call.1} parent=11 // pred_fallthru
          _
      $region12: #{tpu_custom_call.1} parent=5 // pred_fallthru
        _
      %p116 = scmp.lt.s32.totalorder %s15, 2
      // Predicated region
      $region17: #{tpu_custom_call.1} parent=5 // pred_check
        %p117 = pneg %p116
      $region18: #{tpu_custom_call.1} parent=5 // pred_check_branch
        %119 = sbr.rel (%p117) target = $region20
      $region19: #{tpu_custom_call.1} parent=5 // pred_region
        // Predicated region
        $region21: #{tpu_custom_call.1} parent=19 // pred_check
          %p120 = pneg %p35
        $region22: #{tpu_custom_call.1} parent=19 // pred_check_branch
          %122 = sbr.rel (%p120) target = $region24
        $region23: #{tpu_custom_call.1} parent=19 // pred_region
          %s123 = sand.u32 %s25, 1
          %s124 = scalar_lea.sflag [#allocation3], %s123
          %s125 = sand.u32 %s25, 1
          %s126 = smul.addr %s125, 4
          %s127 = scalar_lea.vmem [#allocation2], %s126
          %s129 = ssub.s32 64, 64
          %130 = vsyncadd %s124, %s129
          %s131 = smul.addr %s15, 64
          %s132 = scalar_lea.hbm %s0, %s131
          %s134 = sshll.u32 %s127, 4
          %s135 = int_to_ptr.vmem [resolvable:$true] %s134
          %137 = dma.hbm_to_vmem [thread:$0]  %s132, 64, %s135, %s124
        $region24: #{tpu_custom_call.1} parent=19 // pred_fallthru
          _
      $region20: #{tpu_custom_call.1} parent=5 // pred_fallthru
        _
      %p138 = scmp.le.s32.totalorder 1, %s15
      %p139 = scmp.lt.s32.totalorder %s15, 3
      %p140 = pnand %p138, %p139
      %p141 = pneg %p140
      // Predicated region
      $region25: #{tpu_custom_call.1} parent=5 // pred_check
        _
      $region26: #{tpu_custom_call.1} parent=5 // pred_check_branch
        %143 = sbr.rel (%p140) target = $region28
      $region27: #{tpu_custom_call.1} parent=5 // pred_region
        %s144 = ssub.s32 %s15, 1
        %s145 = sand.u32 %s28, 1
        %s146 = scalar_lea.sflag [#allocation3], %s145
        %s147 = sand.u32 %s28, 1
        %s148 = smul.addr %s147, 4
        %s149 = scalar_lea.vmem [#allocation2], %s148
        // Predicated region
        $region29: #{tpu_custom_call.1} parent=27 // pred_check
          %p150 = pneg %p41
        $region30: #{tpu_custom_call.1} parent=27 // pred_check_branch
          %152 = sbr.rel (%p150) target = $region32
        $region31: #{tpu_custom_call.1} parent=27 // pred_region
          %153 = dma.done %s146, 64
        $region32: #{tpu_custom_call.1} parent=27 // pred_fallthru
          _
        // Predicated region
        $region33: #{tpu_custom_call.1} parent=27 // pred_check
          %p154 = pneg %p62
        $region34: #{tpu_custom_call.1} parent=27 // pred_check_branch
          %156 = sbr.rel (%p154) target = $region36
        $region35: #{tpu_custom_call.1} parent=27 // pred_region
          %157 = dma.done [#allocation6], 768
        $region36: #{tpu_custom_call.1} parent=27 // pred_fallthru
          _
        %s158 = sand.u32 %s28, 1
        %s159 = scalar_lea.sflag [#allocation3], %s158
        %s160 = sand.u32 %s28, 1
        %s161 = smul.addr %s160, 4
        %s162 = scalar_lea.vmem [#allocation2], %s161
        %p163 = pneg %p41
        %p164 = pneg %p38
        %p165 = pneg %p62
        %p166 = pneg %p59
        %p167 = pneg %p88
        %p168 = pneg %p85
        %s169 = sand.u32 %s75, 1
        %s170 = scalar_lea.sflag [#allocation4], %s169
        %s171 = sand.u32 %s75, 1
        %s172 = smul.addr %s171, 8
        %s173 = scalar_lea.vmem [#allocation7], %s172
        %v175 = vld [vmem:[%s149] sm:$0xf]
        %v176 = vld [vmem:[#allocation5] sm:$0xff]
        %v177 = vld [vmem:[#allocation5 + $0x8] sm:$0xf]
        %v178 = vld [vmem:[#allocation5 + $0xc] sm:$0xff]
        %v179 = vld [vmem:[#allocation5 + $0x14] sm:$0xf]
        %v180 = vld [vmem:[#allocation5 + $0x18] sm:$0xff]
        %v181 = vld [vmem:[#allocation5 + $0x20] sm:$0xf]
        %v182 = vld [vmem:[#allocation5 + $0x24] sm:$0xff]
        %v183 = vld [vmem:[#allocation5 + $0x2c] sm:$0xf]
        %v192 = vunpack.c.l.b16 %v176
        %v193 = vunpack.c.h.b16 %v176
        %v194 = vunpack.c.l.b16 %v177
        %v195 = vunpack.c.l.b16 %v178
        %v196 = vunpack.c.h.b16 %v178
        %v197 = vunpack.c.l.b16 %v179
        %v198 = vunpack.c.l.b16 %v180
        %v199 = vunpack.c.h.b16 %v180
        %v200 = vunpack.c.l.b16 %v181
        %v201 = vunpack.c.l.b16 %v182
        %v202 = vunpack.c.h.b16 %v182
        %v203 = vunpack.c.l.b16 %v183
        %v204 = vpack.c.b16 %v195, %v192
        %v205 = vpack.c.b16 %v196, %v193
        %v206 = vpack.c.b16 %v197, %v194
        %v207 = vpack.c.b16 %v201, %v198
        %v208 = vpack.c.b16 %v202, %v199
        %v209 = vpack.c.b16 %v203, %v200
        %vm216 = vcmask 261120
        %v218 = vsel %vm216, %v175, 0
        %220 = vmatprep.subr.bf16.mxu0 %v205
        %221 = vmatpush1.bf16.msra.mxu0 %v204
        %222 = vmatprep.subr.bf16.mxu0 %v208
        %223 = vmatpush1.bf16.msra.mxu0 %v207
        %224 = vmatprep.subr.bf16.mxu0 0
        %225 = vmatpush1.bf16.msra.mxu0 0
        %226 = vmatprep.subr.bf16.mxu0 0
        %227 = vmatpush1.bf16.msra.mxu0 0
        %228 = vmatprep.subr.bf16.mxu0 0
        %229 = vmatpush1.bf16.msra.mxu0 0
        %230 = vmatprep.subr.bf16.mxu0 0
        %231 = vmatpush1.bf16.msra.mxu0 0
        %232 = vmatprep.subr.bf16.mxu0 0
        %233 = vmatpush1.bf16.msra.mxu0 0
        %234 = vmatprep.subr.bf16.mxu0 0
        %235 = vmatpush1.bf16.msra.mxu0 0
        %236 = vmatprep.subr.bf16.mxu0 0
        %237 = vmatpush1.bf16.msra.mxu0 0
        %238 = vmatprep.subr.bf16.mxu0 0
        %239 = vmatpush1.bf16.msra.mxu0 0
        %240 = vmatprep.subr.bf16.mxu0 0
        %241 = vmatpush1.bf16.msra.mxu0 0
        %242 = vmatprep.subr.bf16.mxu0 0
        %243 = vmatpush1.bf16.msra.mxu0 0
        %244 = vmatprep.subr.bf16.mxu0 0
        %245 = vmatpush1.bf16.msra.mxu0 0
        %246 = vmatprep.subr.bf16.mxu0 0
        %247 = vmatpush1.bf16.msra.mxu0 0
        %248 = vmatprep.subr.bf16.mxu0 0
        %249 = vmatpush1.bf16.msra.mxu0 0
        %250 = vmatprep.subr.bf16.mxu0 0
        %251 = vmatpush1.bf16.msra.mxu0 0
        %252 = vmatprep.mubr.bf16.mxu0 0
        %253 = vmatmul.mubr.bf16.gmra.mrb[0].mxu0 %v218
        %v254 = vpop.f32.mrb[0].mxu0
        %v255 = vadd.f32 0.0, %v254
        %v256 = vpop.f32.mrb[0].mxu0
        %v257 = vadd.f32 0.0, %v256
        %v258 = vpop.f32.mrb[0].mxu0
        %v259 = vpop.f32.mrb[0].mxu0
        %260 = vdwg.mxu0
        %261 = vmatprep.subr.bf16.mxu0 0
        %262 = vmatpush1.bf16.msra.mxu0 %v206
        %263 = vmatprep.subr.bf16.mxu0 0
        %264 = vmatpush1.bf16.msra.mxu0 %v209
        %265 = vmatprep.subr.bf16.mxu0 0
        %266 = vmatpush1.bf16.msra.mxu0 0
        %267 = vmatprep.subr.bf16.mxu0 0
        %268 = vmatpush1.bf16.msra.mxu0 0
        %269 = vmatprep.subr.bf16.mxu0 0
        %270 = vmatpush1.bf16.msra.mxu0 0
        %271 = vmatprep.subr.bf16.mxu0 0
        %272 = vmatpush1.bf16.msra.mxu0 0
        %273 = vmatprep.subr.bf16.mxu0 0
        %274 = vmatpush1.bf16.msra.mxu0 0
        %275 = vmatprep.subr.bf16.mxu0 0
        %276 = vmatpush1.bf16.msra.mxu0 0
        %277 = vmatprep.subr.bf16.mxu0 0
        %278 = vmatpush1.bf16.msra.mxu0 0
        %279 = vmatprep.subr.bf16.mxu0 0
        %280 = vmatpush1.bf16.msra.mxu0 0
        %281 = vmatprep.subr.bf16.mxu0 0
        %282 = vmatpush1.bf16.msra.mxu0 0
        %283 = vmatprep.subr.bf16.mxu0 0
        %284 = vmatpush1.bf16.msra.mxu0 0
        %285 = vmatprep.subr.bf16.mxu0 0
        %286 = vmatpush1.bf16.msra.mxu0 0
        %287 = vmatprep.subr.bf16.mxu0 0
        %288 = vmatpush1.bf16.msra.mxu0 0
        %289 = vmatprep.subr.bf16.mxu0 0
        %290 = vmatpush1.bf16.msra.mxu0 0
        %291 = vmatprep.subr.bf16.mxu0 0
        %292 = vmatpush1.bf16.msra.mxu0 0
        %293 = vmatprep.mubr.bf16.mxu0 0
        %294 = vmatmul.mubr.bf16.gmra.mrb[0].mxu0 %v218
        %v295 = vpop.f32.mrb[0].mxu0
        %v296 = vadd.f32 0.0, %v295
        %v297 = vpop.f32.mrb[0].mxu0
        %v298 = vpop.f32.mrb[0].mxu0
        %v299 = vpop.f32.mrb[0].mxu0
        %300 = vdwg.mxu0
        %v301 = vpack.c.bf16 %v255, %v255
        %v302 = vpack.c.bf16 %v257, %v257
        %v303 = vpack.c.bf16 %v296, %v296
        %304 = vmatprep.subr.bf16.mxu0 0
        %305 = vmatpush1.bf16.xpose.msra.mxu0 %v302
        %306 = vmatprep.subr.bf16.mxu0 0
        %307 = vmatpush1.bf16.xpose.msra.mxu0 0
        %308 = vmatprep.subr.bf16.mxu0 0
        %309 = vmatpush1.bf16.xpose.msra.mxu0 0
        %310 = vmatprep.subr.bf16.mxu0 0
        %311 = vmatpush1.bf16.xpose.msra.mxu0 0
        %312 = vmatprep.subr.bf16.mxu0 0
        %313 = vmatpush1.bf16.xpose.msra.mxu0 0
        %314 = vmatprep.subr.bf16.mxu0 0
        %315 = vmatpush1.bf16.xpose.msra.mxu0 0
        %316 = vmatprep.subr.bf16.mxu0 0
        %317 = vmatpush1.bf16.xpose.msra.mxu0 0
        %318 = vmatprep.subr.bf16.mxu0 0
        %319 = vmatpush1.bf16.xpose.msra.mxu0 0
        %320 = vmatprep.subr.bf16.mxu0 0
        %321 = vmatpush1.bf16.xpose.msra.mxu0 0
        %322 = vmatprep.subr.bf16.mxu0 0
        %323 = vmatpush1.bf16.xpose.msra.mxu0 0
        %324 = vmatprep.subr.bf16.mxu0 0
        %325 = vmatpush1.bf16.xpose.msra.mxu0 0
        %326 = vmatprep.subr.bf16.mxu0 0
        %327 = vmatpush1.bf16.xpose.msra.mxu0 0
        %328 = vmatprep.subr.bf16.mxu0 0
        %329 = vmatpush1.bf16.xpose.msra.mxu0 0
        %330 = vmatprep.subr.bf16.mxu0 0
        %331 = vmatpush1.bf16.xpose.msra.mxu0 0
        %332 = vmatprep.subr.bf16.mxu0 0
        %333 = vmatpush1.bf16.xpose.msra.mxu0 0
        %334 = vmatprep.subr.bf16.mxu0 0
        %335 = vmatpush1.bf16.xpose.msra.mxu0 0
        %336 = vmatprep.mubr.bf16.mxu0 0
        %337 = vmatmul.mubr.bf16.gmra.mrb[0].mxu0 %v301
        %v338 = vpop.f32.mrb[0].mxu0
        %v339 = vadd.f32 0.0, %v338
        %v340 = vpop.f32.mrb[0].mxu0
        %v341 = vpop.f32.mrb[0].mxu0
        %v342 = vpop.f32.mrb[0].mxu0
        %343 = vdwg.mxu0
        %vm344 = vcmask 64512
        %v345 = vsel %vm344, %v339, -inf
        %346 = vmax.xlane.f32.xlu0 %v345
        %v347 = vpop.xlane.xlu0 %346
        %v348 = vsub.f32 %v339, %v347
        %v349 = vmul.f32 %v348, 1.442695
        %v350 = vpow.pop %v349
        %v351 = vsel %vm344, %v350, 0.0
        %352 = vadd.xlane.f32.xlu0 %v351
        %v353 = vpop.xlane.xlu0 %352
        %v354 = vpack.c.bf16 %v350, %v350
        %v356 = vsel %vm344, %v354, 0
        %vm358 = vcmask 1043456
        %v360 = vsel %vm358, %v303, 0
        %362 = vmatprep.subr.bf16.mxu0 0
        %363 = vmatpush1.bf16.msra.mxu0 %v360
        %364 = vmatprep.subr.bf16.mxu0 0
        %365 = vmatpush1.bf16.msra.mxu0 0
        %366 = vmatprep.subr.bf16.mxu0 0
        %367 = vmatpush1.bf16.msra.mxu0 0
        %368 = vmatprep.subr.bf16.mxu0 0
        %369 = vmatpush1.bf16.msra.mxu0 0
        %370 = vmatprep.subr.bf16.mxu0 0
        %371 = vmatpush1.bf16.msra.mxu0 0
        %372 = vmatprep.subr.bf16.mxu0 0
        %373 = vmatpush1.bf16.msra.mxu0 0
        %374 = vmatprep.subr.bf16.mxu0 0
        %375 = vmatpush1.bf16.msra.mxu0 0
        %376 = vmatprep.subr.bf16.mxu0 0
        %377 = vmatpush1.bf16.msra.mxu0 0
        %378 = vmatprep.subr.bf16.mxu0 0
        %379 = vmatpush1.bf16.msra.mxu0 0
        %380 = vmatprep.subr.bf16.mxu0 0
        %381 = vmatpush1.bf16.msra.mxu0 0
        %382 = vmatprep.subr.bf16.mxu0 0
        %383 = vmatpush1.bf16.msra.mxu0 0
        %384 = vmatprep.subr.bf16.mxu0 0
        %385 = vmatpush1.bf16.msra.mxu0 0
        %386 = vmatprep.subr.bf16.mxu0 0
        %387 = vmatpush1.bf16.msra.mxu0 0
        %388 = vmatprep.subr.bf16.mxu0 0
        %389 = vmatpush1.bf16.msra.mxu0 0
        %390 = vmatprep.subr.bf16.mxu0 0
        %391 = vmatpush1.bf16.msra.mxu0 0
        %392 = vmatprep.subr.bf16.mxu0 0
        %393 = vmatpush1.bf16.msra.mxu0 0
        %394 = vmatprep.mubr.bf16.mxu0 0
        %395 = vmatmul.mubr.bf16.gmra.mrb[0].mxu0 %v356
        %v396 = vpop.f32.mrb[0].mxu0
        %v397 = vadd.f32 0.0, %v396
        %v398 = vpop.f32.mrb[0].mxu0
        %v399 = vpop.f32.mrb[0].mxu0
        %v400 = vpop.f32.mrb[0].mxu0
        %401 = vdwg.mxu0
        %v402 = vrcp.pop %v353
        %v403 = vmul.f32 1.0, %v402
        %v404 = vmul.f32 %v397, %v403
        %vm405 = vcmask 130048
        %406 = vst.msk [vmem:[%s173] sm:$0xff] %vm405, %v404
        %s407 = sand.u32 %s75, 1
        %s408 = scalar_lea.sflag [#allocation4], %s407
        %s409 = sand.u32 %s75, 1
        %s410 = smul.addr %s409, 8
        %s411 = scalar_lea.vmem [#allocation7], %s410
        // Predicated region
        $region37: #{tpu_custom_call.1} parent=27 // pred_check
          %p412 = pneg %p85
        $region38: #{tpu_custom_call.1} parent=27 // pred_check_branch
          %414 = sbr.rel (%p412) target = $region40
        $region39: #{tpu_custom_call.1} parent=27 // pred_region
          %s416 = ssub.s32 128, 128
          %417 = vsyncadd %s408, %s416
          %s418 = smul.addr %s20, 128
          %s419 = scalar_lea.hbm %s2, %s418
          %s421 = sshll.u32 %s411, 4
          %s422 = int_to_ptr.vmem [resolvable:$true] %s421
          %424 = dma.vmem_to_hbm [thread:$0]  %s422, 128, %s419, %s408
        $region40: #{tpu_custom_call.1} parent=27 // pred_fallthru
          _
      $region28: #{tpu_custom_call.1} parent=5 // pred_fallthru
        _
      %p425 = scmp.le.s32.totalorder 2, %s15
      // Predicated region
      $region41: #{tpu_custom_call.1} parent=5 // pred_check
        %p426 = pneg %p425
      $region42: #{tpu_custom_call.1} parent=5 // pred_check_branch
        %428 = sbr.rel (%p426) target = $region44
      $region43: #{tpu_custom_call.1} parent=5 // pred_region
        %s429 = ssub.s32 %s15, 2
        // Predicated region
        $region45: #{tpu_custom_call.1} parent=43 // pred_check
          %p430 = pneg %p91
        $region46: #{tpu_custom_call.1} parent=43 // pred_check_branch
          %432 = sbr.rel (%p430) target = $region48
        $region47: #{tpu_custom_call.1} parent=43 // pred_region
          %s433 = sand.u32 %s76, 1
          %s434 = scalar_lea.sflag [#allocation4], %s433
          %s435 = sand.u32 %s76, 1
          %s436 = smul.addr %s435, 8
          %s437 = scalar_lea.vmem [#allocation7], %s436
          %438 = dma.done %s434, 128
        $region48: #{tpu_custom_call.1} parent=43 // pred_fallthru
          _
      $region44: #{tpu_custom_call.1} parent=5 // pred_fallthru
        _
    $region6: #{tpu_custom_call.1} parent=1 // loop_footer
      %s19 = sadd.s32 1, %s15
    $region7: #{tpu_custom_call.1} parent=1 // loop_footer_branch
      %14 = sbr.rel target = $region3
    $region8: #{tpu_custom_call.1} parent=1 // loop_exit
      _
    %439 = vsyncpa [#allocation3], 1
    %s440 = scalar_lea.sflag [#allocation3], 1
    %441 = vsyncpa %s440, 1
    %442 = vsyncpa [#allocation6], 1
    %443 = vsyncpa [#allocation4], 1
    %s444 = scalar_lea.sflag [#allocation4], 1
    %445 = vsyncpa %s444, 1

</llo_original>
